<compile_context>
chip_gen: v5e
topology: v5e:2x2
jax: 0.10.0
libtpu: 0.0.40
codegen_flags: <defaults>
</compile_context>

<pallas_src>
import functools

import numpy as np
import jax
import jax.numpy as jnp
from jax import lax
from jax.experimental import pallas as pl
from jax.experimental.pallas import tpu as pltpu


# ----------------------------------------------------------------------------
# Pallas kernel
# ----------------------------------------------------------------------------
def _instance_norm_kernel(x_ref, o_ref, *, inv_hw, eps):
    # x_ref / o_ref: (tile_rows, HW).  Each row is one (n, c) instance with its
    # full H*W spatial extent on the lane axis, so per-row stats are a single
    # cross-lane reduction (no cross-row communication -> partial tiles safe).
    x = x_ref[...].astype(jnp.float32)
    mean = jnp.sum(x, axis=-1, keepdims=True) * inv_hw      # XLU reduce
    xc = x - mean
    var = jnp.sum(xc * xc, axis=-1, keepdims=True) * inv_hw  # E[(x - mu)^2]
    scale = lax.rsqrt(var + eps)                              # EUP transcendental
    o_ref[...] = (xc * scale).astype(o_ref.dtype)


# ----------------------------------------------------------------------------
# Wrapper
# ----------------------------------------------------------------------------
def instance_norm(x, epsilon=1e-8, *, block_rows=None):
    """y = (x - mean_{H,W}(x)) * rsqrt(mean_{H,W}((x - mean)^2) + eps).

    Matches the PyTorch InstanceNorm module (per-instance, per-channel stats,
    biased variance, no affine).  x is NCHW.
    """
    n, c, h, w = x.shape
    nc, hw = n * c, h * w
    # NCHW -> (N*C, H*W): contiguous reshape, no data movement.
    xf = x.reshape(nc, hw)

    itemsize = jnp.dtype(x.dtype).itemsize
    if block_rows is None:
        # Biggest tile that keeps (input + output) x double-buffering well
        # under the default scoped-VMEM limit on v5e/v6e/v7x (~16 MiB budget).
        budget = 16 * 1024 * 1024
        per_row = 2 * 2 * hw * itemsize          # in + out, double-buffered
        block_rows = max(8, budget // per_row)
    if block_rows >= nc:
        tr = nc                                  # full-extent block: always legal
    else:
        tr = max(8, (block_rows // 8) * 8)       # keep (8, ...) sublane alignment

    # TODO(synk): for extremely large H*W (row does not fit VMEM) a two-pass /
    # Welford tiling over the spatial axis would be needed; not required here.
    out = pl.pallas_call(
        functools.partial(_instance_norm_kernel,
                          inv_hw=1.0 / float(hw), eps=float(epsilon)),
        out_shape=jax.ShapeDtypeStruct((nc, hw), x.dtype),
        grid_spec=pltpu.PrefetchScalarGridSpec(
            num_scalar_prefetch=0,
            grid=(pl.cdiv(nc, tr),),
            in_specs=[pl.BlockSpec((tr, hw), lambda i: (i, 0))],
            out_specs=pl.BlockSpec((tr, hw), lambda i: (i, 0)),
        ),
        compiler_params=pltpu.CompilerParams(
            # Row tiles are independent -> shard across both TCs on v7x;
            # neutral on single-TC v5e/v6e.  No oversized vmem_limit request.
            dimension_semantics=("parallel",),
        ),
    )(xf)
    return out.reshape(n, c, h, w)


# ----------------------------------------------------------------------------
# Pure-JAX reference (mirrors the PyTorch forward exactly)
# ----------------------------------------------------------------------------
def instance_norm_ref(x, epsilon=1e-8):
    xc = x - jnp.mean(x, axis=(2, 3), keepdims=True)
    var = jnp.mean(xc * xc, axis=(2, 3), keepdims=True)
    return xc * lax.rsqrt(var + epsilon)


if __name__ == "__main__":
    key = jax.random.PRNGKey(0)

    # Small shape consistent with the module: batch=2, channels=4, spatial=16.
    x = jax.random.normal(key, (2, 4, 16, 16), jnp.float32)
    fwd = jax.jit(instance_norm)
    out = fwd(x)
    jax.block_until_ready(out)
    np.testing.assert_allclose(np.asarray(out), np.asarray(instance_norm_ref(x)),
                               rtol=1e-4, atol=1e-4)

    # Second check exercising a multi-step (tiled) grid.
    x2 = jax.random.normal(jax.random.fold_in(key, 1), (4, 32, 24, 24),
                           jnp.float32)
    out2 = jax.jit(functools.partial(instance_norm, block_rows=32))(x2)
    jax.block_until_ready(out2)
    np.testing.assert_allclose(np.asarray(out2),
                               np.asarray(instance_norm_ref(x2)),
                               rtol=1e-4, atol=1e-4)

    print("KERNEL_OK")
</pallas_src>

<mosaic_0001>
module attributes {stable_mosaic.version = 11 : i64} {
  func.func @_instance_norm_kernel(%arg0: i32, %arg1: memref<8x256xf32, #tpu.memory_space<vmem>>, %arg2: memref<8x256xf32, #tpu.memory_space<vmem>>) attributes {dimension_semantics = [#tpu.dimension_semantics<parallel>], iteration_bounds = array<i64: 1>, scalar_prefetch = 0 : i64, scratch_operands = 0 : i64, tpu.core_type = #tpu.core_type<tc>, window_params = [{transform_indices = @transform_0, window_bounds = array<i64: 8, 256>}, {transform_indices = @transform_1, window_bounds = array<i64: 8, 256>}]} {
    %c0 = arith.constant 0 : index
    %c0_0 = arith.constant 0 : index
    %0 = vector.load %arg1[%c0, %c0_0] : memref<8x256xf32, #tpu.memory_space<vmem>>, vector<8x256xf32>
    %cst = arith.constant dense<0.000000e+00> : vector<8xf32>
    %1 = vector.multi_reduction <add>, %0, %cst [1] : vector<8x256xf32> to vector<8xf32>
    %2 = vector.shape_cast %1 : vector<8xf32> to vector<8x1xf32>
    %cst_1 = arith.constant 3.906250e-03 : f32
    %3 = vector.broadcast %cst_1 : f32 to vector<8x1xf32>
    %4 = arith.mulf %2, %3 : vector<8x1xf32>
    %5 = vector.broadcast %4 : vector<8x1xf32> to vector<8x256xf32>
    %6 = arith.subf %0, %5 : vector<8x256xf32>
    %7 = arith.mulf %6, %6 : vector<8x256xf32>
    %cst_2 = arith.constant dense<0.000000e+00> : vector<8xf32>
    %8 = vector.multi_reduction <add>, %7, %cst_2 [1] : vector<8x256xf32> to vector<8xf32>
    %9 = vector.shape_cast %8 : vector<8xf32> to vector<8x1xf32>
    %cst_3 = arith.constant 3.906250e-03 : f32
    %10 = vector.broadcast %cst_3 : f32 to vector<8x1xf32>
    %11 = arith.mulf %9, %10 : vector<8x1xf32>
    %cst_4 = arith.constant 9.99999993E-9 : f32
    %12 = vector.broadcast %cst_4 : f32 to vector<8x1xf32>
    %13 = arith.addf %11, %12 : vector<8x1xf32>
    %14 = math.rsqrt %13 : vector<8x1xf32>
    %15 = vector.broadcast %14 : vector<8x1xf32> to vector<8x256xf32>
    %16 = arith.mulf %6, %15 : vector<8x256xf32>
    %c0_5 = arith.constant 0 : index
    %c0_6 = arith.constant 0 : index
    %17 = vector.load %arg2[%c0_5, %c0_6] : memref<8x256xf32, #tpu.memory_space<vmem>>, vector<8x256xf32>
    tpu.vector_store %arg2[%c0_5, %c0_6], %16 {strides = array<i32>} : memref<8x256xf32, #tpu.memory_space<vmem>>, vector<8x256xf32>,
    return
  }
  func.func @transform_0(%arg0: i32) -> (i32, i32) {
    %c0_i32 = arith.constant 0 : i32
    %c0_i32_0 = arith.constant 0 : i32
    return %arg0, %c0_i32 : i32, i32
  }
  func.func @transform_1(%arg0: i32) -> (i32, i32) {
    %c0_i32 = arith.constant 0 : i32
    %c0_i32_0 = arith.constant 0 : i32
    return %arg0, %c0_i32 : i32, i32
  }
}

</mosaic_0001>

<llo_original>
// kernel: instance_norm.1
$region0: #{instance_norm.1}
  #allocation0 [shape = 'u32[]', space=smem, size = 0x4, offset = 0x4, fixed_abs, tag = 'smem constant byte address 0x4 - core index']
  #allocation1 [shape = 'u32[72,128]{1,0:T(1,128)}', space=vmem, size = 0x9000, scoped, tag = 'internal scratch']
  %s0 = inlined_call_operand.vmem [shape: f32[8,256], index: 0, kind: input, shape index: {}]
  %s1 = inlined_call_operand.vmem [shape: f32[8,256], index: 1, kind: output, shape index: {}]
  %s2 = sld [smem:[#allocation0]]
  $region14: #{instance_norm.1} parent=0
    _
  %s4 = ssub.s32 1, %s2
  %s5 = scalar_select 0, %s4, %s2
  // Predicated region
  $region2: #{instance_norm.1} parent=0 // pred_check
    _
  $region3: #{instance_norm.1} parent=0 // pred_check_branch
    %7 = sbr.rel (0) target = $region5
  $region4: #{instance_norm.1} parent=0 // pred_region
    _
  $region5: #{instance_norm.1} parent=0 // pred_fallthru
    _
  %v8 = vld [vmem:[%s0] sm:$0xff]
  %v9 = vld [vmem:[%s0 + $0x8] sm:$0xff]
  %v10 = vadd.f32 %v8, %v9
  %11 = vadd.xlane.f32.xlu0 %v10
  %v12 = vpop.xlane.xlu0 %11
  %v13 = vmul.f32 %v12, 0.00390625
  %v14 = vsub.f32 %v8, %v13
  %v15 = vsub.f32 %v9, %v13
  %v16 = vmul.f32 %v14, %v14
  %v17 = vmul.f32 %v15, %v15
  %v18 = vadd.f32 %v16, %v17
  %19 = vadd.xlane.f32.xlu0 %v18
  %v20 = vpop.xlane.xlu0 %19
  %v21 = vmul.f32 %v20, 0.00390625
  %v22 = vadd.f32 %v21, 1e-08
  %v23 = vrsqrt.pop %v22
  %v24 = vmul.f32 %v23, %v22
  %v25 = vmul.f32 %v24, %v23
  %v26 = vmul.f32 0.5, %v25
  %v27 = vsub.f32 1.5, %v26
  %v28 = vmul.f32 %v23, %v27
  %vm29 = vweird.f32 %v22
  %vm30 = vweird.f32 %v23
  %vm31 = vmor %vm29, %vm30
  %v32 = vsel %vm31, %v23, %v28
  %v33 = vmul.f32 %v14, %v32
  %v34 = vmul.f32 %v15, %v32
  %35 = vst [vmem:[%s1] sm:$0xff] %v33
  %36 = vst [vmem:[%s1 + $0x8] sm:$0xff] %v34
  // Predicated region
  $region6: #{instance_norm.1} parent=0 // pred_check
    _
  $region7: #{instance_norm.1} parent=0 // pred_check_branch
    %38 = sbr.rel (0) target = $region9
  $region8: #{instance_norm.1} parent=0 // pred_region
    _
  $region9: #{instance_norm.1} parent=0 // pred_fallthru
    _
  // Predicated region
  $region10: #{instance_norm.1} parent=0 // pred_check
    _
  $region11: #{instance_norm.1} parent=0 // pred_check_branch
    %40 = sbr.rel (0) target = $region13
  $region12: #{instance_norm.1} parent=0 // pred_region
    _
  $region13: #{instance_norm.1} parent=0 // pred_fallthru
    _

</llo_original>
